<compile_context>
chip_gen: v7x
topology: tpu7x:2x2x1
jax: 0.10.0
libtpu: 0.0.40
codegen_flags: <defaults>
</compile_context>

<pallas_src>
import functools

import jax
import jax.numpy as jnp
from jax.experimental import pallas as pl
from jax.experimental.pallas import tpu as pltpu


# ----------------------------------------------------------------------------
# Generation-aware VMEM budgets (v5e/v6e: 128 MiB physical, v7x: 64 MiB).
# ----------------------------------------------------------------------------
def _vmem_capacity_bytes():
    try:
        return int(pltpu.get_tpu_info().vmem_capacity_bytes)
    except Exception:
        return 64 << 20  # conservative fallback: assume v7x-class 64 MiB

_VMEM_CAPACITY = _vmem_capacity_bytes()
if _VMEM_CAPACITY >= (100 << 20):        # v5e / v6e (128 MiB VMEM)
    _VMEM_BUDGET = 80 << 20              # double-buffered working-set budget
    _VMEM_LIMIT_DEFAULT = 96 << 20
else:                                    # v7x (64 MiB VMEM)
    _VMEM_BUDGET = 24 << 20
    _VMEM_LIMIT_DEFAULT = 48 << 20


def _make_batchnorm_kernel(eps, decay, n):
    inv_n = 1.0 / float(n)
    eps = float(eps)
    decay = float(decay)

    def kernel(x_ref, stats_ref, y_ref, stats_out_ref):
        x = x_ref[...].astype(jnp.float32)                      # (N, TILE_D)
        # Two-pass (shifted) moments: robust against |mean| >> std, and the
        # (x - mean) temporary is reused for the normalized output.
        mean = jnp.sum(x, axis=0, keepdims=True) * inv_n        # (1, TILE_D)
        diff = x - mean
        var = jnp.sum(diff * diff, axis=0, keepdims=True) * inv_n  # biased var
        var_eps = var + eps
        inv_std = jax.lax.rsqrt(var_eps)                        # EUP slot
        y_ref[...] = (diff * inv_std).astype(y_ref.dtype)

        # Fused running-stat EMA update (packed (2, TILE_D) input block).
        stats = stats_ref[...].astype(jnp.float32)
        rm = stats[0:1, :]
        rv = stats[1:2, :]
        new_rm = rm - decay * (rm - mean)
        new_rv = rv - decay * (rv - var)
        # Per-feature -0.5*log(var+eps); summed over the real D in the wrapper.
        nhl = -0.5 * jnp.log(var_eps)
        stats_out_ref[...] = jnp.concatenate([new_rm, new_rv, nhl], axis=0)

    return kernel


def _pick_tile_d(n, d, itemsize, *, vmem_budget_bytes, target_block_bytes):
    """Pick the lane-tile width (a multiple of 128, or the full D) and grid."""
    # Per-column bytes of one double-buffered pipeline step:
    #   x block + y block (n rows, input dtype) and the packed
    #   (2, t) stats-in / (3, t) stats-out f32 blocks.
    per_col = 2 * (2 * n * itemsize + 5 * 4)
    cap = max(128, (vmem_budget_bytes // per_col) // 128 * 128)
    # Target ~a few MiB of x per tile to amortize the ~0.35us per-grid-step
    # overhead, never below 512 lanes (lane-dense stores / HBM roofline).
    tgt = max(512, target_block_bytes // max(1, n * itemsize))
    tile_d = min(cap, tgt)
    tile_d = max(128, (tile_d // 128) * 128)

    if tile_d >= d:
        # Whole feature dim in one block (block == full dim is always legal,
        # even when D is not a multiple of 128).
        tile_d, num_tiles = d, 1
        # Dual-TensorCore parts (v7x): give the parallel grid >= 2 tiles when
        # D is wide enough; costs one extra tiny step on single-TC chips.
        if d >= 256:
            half = -(-d // 2)
            tile_d = max(128, -(-half // 128) * 128)
            num_tiles = -(-d // tile_d)
    else:
        num_tiles = -(-d // tile_d)
    return tile_d, num_tiles


@functools.partial(jax.jit, static_argnames=("eps", "decay"))
def batchnorm_forward(x, running_mean, running_var, *, eps=1e-6, decay=0.1):
    """Training-mode forward of the real-nvp BatchNorm.

    Returns (y, logdet, new_running_mean, new_running_var) with
      y      = (x - mean) / sqrt(var + eps)        (mean/var over batch, biased)
      logdet = -0.5 * sum(log(var + eps)) repeated over the batch.
    """
    n, d = x.shape
    itemsize = jnp.dtype(x.dtype).itemsize
    tile_d, num_tiles = _pick_tile_d(
        n, d, itemsize,
        vmem_budget_bytes=_VMEM_BUDGET,
        target_block_bytes=2 << 20,
    )
    # TODO(synk): add an N-tiled path (second "arbitrary" grid axis with VMEM
    # sum/sumsq accumulators + finalize pass) for very large batch sizes;
    # for now we just widen the VMEM limit to cover the chosen tile.
    step_bytes = 2 * (2 * n * itemsize + 5 * 4) * tile_d
    vmem_limit = int(min(_VMEM_CAPACITY - (8 << 20),
                         max(_VMEM_LIMIT_DEFAULT, step_bytes + (4 << 20))))

    # Pack running stats into a single (2, D) input (fewer DMAs per step).
    stats_in = jnp.stack(
        [running_mean.astype(jnp.float32), running_var.astype(jnp.float32)],
        axis=0,
    )

    kernel = _make_batchnorm_kernel(eps, decay, n)
    cost = pl.CostEstimate(
        flops=int(6 * n * d + 12 * d),
        transcendentals=int(2 * d),
        bytes_accessed=int(2 * n * d * itemsize + 5 * d * 4),
    )

    y, stats_out = pl.pallas_call(
        kernel,
        out_shape=(
            jax.ShapeDtypeStruct((n, d), x.dtype),
            jax.ShapeDtypeStruct((3, d), jnp.float32),
        ),
        grid_spec=pltpu.PrefetchScalarGridSpec(
            num_scalar_prefetch=0,
            grid=(num_tiles,),
            in_specs=[
                pl.BlockSpec((n, tile_d), lambda i: (0, i)),   # x
                pl.BlockSpec((2, tile_d), lambda i: (0, i)),   # packed rm/rv
            ],
            out_specs=[
                pl.BlockSpec((n, tile_d), lambda i: (0, i)),   # y
                pl.BlockSpec((3, tile_d), lambda i: (0, i)),   # rm/rv/nhl
            ],
        ),
        compiler_params=pltpu.CompilerParams(
            dimension_semantics=("parallel",),       # D-tiles are independent
            vmem_limit_bytes=vmem_limit,
        ),
        cost_estimate=cost,
    )(x, stats_in)

    new_running_mean = stats_out[0].astype(running_mean.dtype)
    new_running_var = stats_out[1].astype(running_var.dtype)
    logdet_scalar = jnp.sum(stats_out[2])            # f32 accumulation
    logdet = jnp.full((n,), logdet_scalar).astype(x.dtype)

    return y, logdet, new_running_mean, new_running_var


if __name__ == "__main__":
    def reference(x, rm, rv, eps=1e-6, decay=0.1):
        mean = jnp.mean(x, axis=0)
        var = jnp.mean((x - mean) ** 2, axis=0)
        var_eps = var + eps
        y = (x - mean) / jnp.sqrt(var_eps)
        logdet = jnp.full((x.shape[0],), -0.5 * jnp.sum(jnp.log(var_eps)),
                          dtype=x.dtype)
        return y, logdet, rm - decay * (rm - mean), rv - decay * (rv - var)

    # Case 1: module-like small shape (dim=32, batch=8) -> one full-D tile.
    N, D = 8, 32
    x = jax.random.normal(jax.random.PRNGKey(0), (N, D), dtype=jnp.float32)
    rm = jnp.zeros((D,), jnp.float32)
    rv = jnp.ones((D,), jnp.float32)
    out = jax.block_until_ready(batchnorm_forward(x, rm, rv))
    ref = reference(x, rm, rv)
    for got, want in zip(out, ref):
        assert got.shape == want.shape
        assert jnp.allclose(got, want, atol=1e-4, rtol=1e-5)

    # Case 2: D=300 -> tile split to 256, 2-tile grid with a masked partial
    # last block (exercises the ragged-D path with no wrapper pad/slice).
    N2, D2 = 16, 300
    x2 = jax.random.normal(jax.random.PRNGKey(1), (N2, D2), dtype=jnp.float32)
    x2 = x2 * 2.0 + 3.0   # nonzero mean/scale to exercise the two-pass moments
    rm2 = jnp.zeros((D2,), jnp.float32)
    rv2 = jnp.ones((D2,), jnp.float32)
    out2 = jax.block_until_ready(batchnorm_forward(x2, rm2, rv2))
    ref2 = reference(x2, rm2, rv2)
    for got, want in zip(out2, ref2):
        assert got.shape == want.shape
        assert jnp.allclose(got, want, atol=1e-4, rtol=1e-5)

    print("KERNEL_OK")
</pallas_src>

<mosaic_0001>
module attributes {stable_mosaic.version = 11 : i64} {
  func.func @kernel(%arg0: i32, %arg1: memref<8x32xf32, #tpu.memory_space<vmem>>, %arg2: memref<2x32xf32, #tpu.memory_space<vmem>>, %arg3: memref<8x32xf32, #tpu.memory_space<vmem>>, %arg4: memref<3x32xf32, #tpu.memory_space<vmem>>) attributes {dimension_semantics = [#tpu.dimension_semantics<parallel>], iteration_bounds = array<i64: 1>, scalar_prefetch = 0 : i64, scratch_operands = 0 : i64, tpu.core_type = #tpu.core_type<tc>, window_params = [{transform_indices = @transform_0, window_bounds = array<i64: 8, 32>}, {transform_indices = @transform_1, window_bounds = array<i64: 2, 32>}, {transform_indices = @transform_2, window_bounds = array<i64: 8, 32>}, {transform_indices = @transform_3, window_bounds = array<i64: 3, 32>}]} {
    %c0 = arith.constant 0 : index
    %c0_0 = arith.constant 0 : index
    %0 = vector.load %arg1[%c0, %c0_0] : memref<8x32xf32, #tpu.memory_space<vmem>>, vector<8x32xf32>
    %cst = arith.constant dense<0.000000e+00> : vector<32xf32>
    %1 = vector.multi_reduction <add>, %0, %cst [0] : vector<8x32xf32> to vector<32xf32>
    %2 = vector.shape_cast %1 : vector<32xf32> to vector<1x32xf32>
    %cst_1 = arith.constant 1.250000e-01 : f32
    %3 = vector.broadcast %cst_1 : f32 to vector<1x32xf32>
    %4 = arith.mulf %2, %3 : vector<1x32xf32>
    %5 = vector.broadcast %4 : vector<1x32xf32> to vector<8x32xf32>
    %6 = arith.subf %0, %5 : vector<8x32xf32>
    %7 = arith.mulf %6, %6 : vector<8x32xf32>
    %cst_2 = arith.constant dense<0.000000e+00> : vector<32xf32>
    %8 = vector.multi_reduction <add>, %7, %cst_2 [0] : vector<8x32xf32> to vector<32xf32>
    %9 = vector.shape_cast %8 : vector<32xf32> to vector<1x32xf32>
    %cst_3 = arith.constant 1.250000e-01 : f32
    %10 = vector.broadcast %cst_3 : f32 to vector<1x32xf32>
    %11 = arith.mulf %9, %10 : vector<1x32xf32>
    %cst_4 = arith.constant 9.99999997E-7 : f32
    %12 = vector.broadcast %cst_4 : f32 to vector<1x32xf32>
    %13 = arith.addf %11, %12 : vector<1x32xf32>
    %14 = math.rsqrt %13 : vector<1x32xf32>
    %15 = vector.broadcast %14 : vector<1x32xf32> to vector<8x32xf32>
    %16 = arith.mulf %6, %15 : vector<8x32xf32>
    %c0_5 = arith.constant 0 : index
    %c0_6 = arith.constant 0 : index
    %17 = vector.load %arg3[%c0_5, %c0_6] : memref<8x32xf32, #tpu.memory_space<vmem>>, vector<8x32xf32>
    tpu.vector_store %arg3[%c0_5, %c0_6], %16 {strides = array<i32>} : memref<8x32xf32, #tpu.memory_space<vmem>>, vector<8x32xf32>,
    %c0_7 = arith.constant 0 : index
    %c0_8 = arith.constant 0 : index
    %18 = vector.load %arg2[%c0_7, %c0_8] : memref<2x32xf32, #tpu.memory_space<vmem>>, vector<2x32xf32>
    %19 = vector.extract_strided_slice %18 {offsets = [0, 0], sizes = [1, 32], strides = [1, 1]} : vector<2x32xf32> to vector<1x32xf32>
    %20 = vector.extract_strided_slice %18 {offsets = [1, 0], sizes = [1, 32], strides = [1, 1]} : vector<2x32xf32> to vector<1x32xf32>
    %21 = arith.subf %19, %4 : vector<1x32xf32>
    %cst_9 = arith.constant 1.000000e-01 : f32
    %22 = vector.broadcast %cst_9 : f32 to vector<1x32xf32>
    %23 = arith.mulf %22, %21 : vector<1x32xf32>
    %24 = arith.subf %19, %23 : vector<1x32xf32>
    %25 = arith.subf %20, %11 : vector<1x32xf32>
    %cst_10 = arith.constant 1.000000e-01 : f32
    %26 = vector.broadcast %cst_10 : f32 to vector<1x32xf32>
    %27 = arith.mulf %26, %25 : vector<1x32xf32>
    %28 = arith.subf %20, %27 : vector<1x32xf32>
    %29 = math.log %13 : vector<1x32xf32>
    %cst_11 = arith.constant -5.000000e-01 : f32
    %30 = vector.broadcast %cst_11 : f32 to vector<1x32xf32>
    %31 = arith.mulf %30, %29 : vector<1x32xf32>
    %32 = tpu.concatenate %24, %28, %31 in 0 : vector<1x32xf32>, vector<1x32xf32>, vector<1x32xf32> -> vector<3x32xf32>
    %c0_12 = arith.constant 0 : index
    %c0_13 = arith.constant 0 : index
    %33 = vector.load %arg4[%c0_12, %c0_13] : memref<3x32xf32, #tpu.memory_space<vmem>>, vector<3x32xf32>
    tpu.vector_store %arg4[%c0_12, %c0_13], %32 {strides = array<i32>} : memref<3x32xf32, #tpu.memory_space<vmem>>, vector<3x32xf32>,
    return
  }
  func.func @transform_0(%arg0: i32) -> (i32, i32) {
    %c0_i32 = arith.constant 0 : i32
    %c0_i32_0 = arith.constant 0 : i32
    return %c0_i32, %arg0 : i32, i32
  }
  func.func @transform_1(%arg0: i32) -> (i32, i32) {
    %c0_i32 = arith.constant 0 : i32
    %c0_i32_0 = arith.constant 0 : i32
    return %c0_i32, %arg0 : i32, i32
  }
  func.func @transform_2(%arg0: i32) -> (i32, i32) {
    %c0_i32 = arith.constant 0 : i32
    %c0_i32_0 = arith.constant 0 : i32
    return %c0_i32, %arg0 : i32, i32
  }
  func.func @transform_3(%arg0: i32) -> (i32, i32) {
    %c0_i32 = arith.constant 0 : i32
    %c0_i32_0 = arith.constant 0 : i32
    return %c0_i32, %arg0 : i32, i32
  }
}

</mosaic_0001>

<llo_original>
// kernel: batchnorm_forward.1
$region0: #{batchnorm_forward.1}
  #allocation0 [shape = 'u32[]', space=smem, size = 0x4, offset = 0x4, fixed_abs, tag = 'smem constant byte address 0x4 - core index']
  #allocation1 [shape = 'u32[144,128]{1,0:T(1,128)}', space=vmem, size = 0x12000, scoped, tag = 'internal scratch']
  %s0 = inlined_call_operand.vmem [shape: f32[8,32], index: 0, kind: input, shape index: {}]
  %s1 = inlined_call_operand.vmem [shape: f32[2,32], index: 1, kind: input, shape index: {}]
  %s2 = inlined_call_operand.hbm [shape: f32[8,32], index: 2, kind: output, shape index: {0}]
  %s3 = inlined_call_operand.vmem [shape: f32[3,32], index: 3, kind: output, shape index: {1}]
  %4 = xla_tuple %s2, %s3
  %s5 = sld [smem:[#allocation0]]
  $region26: #{batchnorm_forward.1} parent=0
    _
  %s7 = ssub.s32 1, %s5
  %s8 = scalar_select 0, %s7, %s5
  $region1: #{batchnorm_forward.1} parent=0
    #allocation2 [shape = 'u8[4096]{0}', space=vmem, size = 0x1000, scoped, tag = 'output window, operand 0, single buffered']
    #allocation3 [shape = 's32[1]{0}', space=sflag, size = 0x4, scoped, tag = 'scoped memory for batchnorm_forward.1']
    %9 = vsyncpa [#allocation3], 0
    // Predicated region
    $region2: #{batchnorm_forward.1} parent=1 // pred_check
      _
    $region3: #{batchnorm_forward.1} parent=1 // pred_check_branch
      %11 = sbr.rel (0) target = $region5
    $region4: #{batchnorm_forward.1} parent=1 // pred_region
      _
    $region5: #{batchnorm_forward.1} parent=1 // pred_fallthru
      _
    // Predicated region
    $region6: #{batchnorm_forward.1} parent=1 // pred_check
      _
    $region7: #{batchnorm_forward.1} parent=1 // pred_check_branch
      %13 = sbr.rel (0) target = $region9
    $region8: #{batchnorm_forward.1} parent=1 // pred_region
      _
    $region9: #{batchnorm_forward.1} parent=1 // pred_fallthru
      _
    %v14 = vld [vmem:[%s0] sm:$0xff]
    %vm15 = vcmask 261120
    %v16 = vsel %vm15, %v14, 0.0
    %v17 = vrot.slane %v16, 4
    %v18 = vadd.f32 %v16, %v17
    %v19 = vrot.slane %v18, 2
    %v20 = vadd.f32 %v18, %v19
    %v21 = vrot.slane %v20, 1
    %v22 = vadd.f32 %v20, %v21
    %v23 = vmul.f32 %v22, 0.125
    %v24 = vsub.f32 %v14, %v23
    %v25 = vmul.f32 %v24, %v24
    %v26 = vsel %vm15, %v25, 0.0
    %v27 = vrot.slane %v26, 4
    %v28 = vadd.f32 %v26, %v27
    %v29 = vrot.slane %v28, 2
    %v30 = vadd.f32 %v28, %v29
    %v31 = vrot.slane %v30, 1
    %v32 = vadd.f32 %v30, %v31
    %v33 = vmul.f32 %v32, 0.125
    %v34 = vadd.f32 %v33, 1e-06
    %v35 = vrsqrt.pop %v34
    %v36 = vmul.f32 %v24, %v35
    %37 = vst.msk [vmem:[#allocation2] sm:$0xff] %vm15, %v36
    %v38 = vld [vmem:[%s1] sm:$0x3]
    %v39 = vsub.f32 %v38, %v23
    %v40 = vmul.f32 %v39, 0.1
    %v41 = vsub.f32 %v38, %v40
    %v42 = vsub.f32 %v38, %v33
    %v43 = vmul.f32 %v42, 0.1
    %v44 = vsub.f32 %v38, %v43
    %v45 = vlog2.pop %v34
    %v46 = vmul.f32 %v45, 0.6931472
    %v47 = vmul.f32 %v46, -0.5
    %vm48 = vcmask 1040384
    %v49 = vsel %vm48, %v41, %v44
    %vm50 = vcmask 1041408
    %v51 = vsel %vm50, %v49, %v47
    %vm52 = vcmask 256000
    %53 = vst.msk [vmem:[%s3] sm:$0x7] %vm52, %v51
    // Predicated region
    $region10: #{batchnorm_forward.1} parent=1 // pred_check
      _
    $region11: #{batchnorm_forward.1} parent=1 // pred_check_branch
      %55 = sbr.rel (0) target = $region13
    $region12: #{batchnorm_forward.1} parent=1 // pred_region
      %s57 = ssub.s32 128, 128
      %58 = vsyncadd [#allocation3], %s57
      %s60 = sshll.u32 [#allocation2], 4
      %s61 = int_to_ptr.vmem [resolvable:$true] %s60
      %63 = dma.vmem_to_hbm [thread:$0]  %s61, 128, %s2, [#allocation3]
    $region13: #{batchnorm_forward.1} parent=1 // pred_fallthru
      _
    // Predicated region
    $region14: #{batchnorm_forward.1} parent=1 // pred_check
      _
    $region15: #{batchnorm_forward.1} parent=1 // pred_check_branch
      %65 = sbr.rel (0) target = $region17
    $region16: #{batchnorm_forward.1} parent=1 // pred_region
      _
    $region17: #{batchnorm_forward.1} parent=1 // pred_fallthru
      _
    // Predicated region
    $region18: #{batchnorm_forward.1} parent=1 // pred_check
      _
    $region19: #{batchnorm_forward.1} parent=1 // pred_check_branch
      %67 = sbr.rel (0) target = $region21
    $region20: #{batchnorm_forward.1} parent=1 // pred_region
      %68 = dma.done [#allocation3], 128
    $region21: #{batchnorm_forward.1} parent=1 // pred_fallthru
      _
    // Predicated region
    $region22: #{batchnorm_forward.1} parent=1 // pred_check
      _
    $region23: #{batchnorm_forward.1} parent=1 // pred_check_branch
      %70 = sbr.rel (0) target = $region25
    $region24: #{batchnorm_forward.1} parent=1 // pred_region
      _
    $region25: #{batchnorm_forward.1} parent=1 // pred_fallthru
      _
    %71 = vsyncpa [#allocation3], 1

</llo_original>
